<compile_context>
chip_gen: v7x
topology: tpu7x:2x2x1
jax: 0.10.0
libtpu: 0.0.40
codegen_flags: <defaults>
</compile_context>

<pallas_src>
import functools

import jax
import jax.numpy as jnp
from jax.experimental import pallas as pl
from jax.experimental.pallas import tpu as pltpu


def _dfl_kernel(x_ref, w_ref, o_ref, *, exp_dtype):
    """Fused softmax + expectation over the c1 bins.

    x_ref: (R, c1, A) block, w_ref: (1, c1, 1) bin indices, o_ref: (R, A).

    NOTE: padded rows/lanes of edge blocks run exp() over garbage (possibly
    producing inf); those values are masked on store, so this is benign --
    do not "fix" it into a slower guarded path.
    """
    x = x_ref[...].astype(exp_dtype)                 # (R, c1, A)
    m = jnp.max(x, axis=1, keepdims=True)            # (R, 1, A)
    e = jnp.exp(x - m)                               # exp front-end (EUP)
    ef = e.astype(jnp.float32)                       # accumulate in f32
    w = w_ref[...].astype(jnp.float32)               # (1, c1, 1) fixed weights
    num = jnp.sum(ef * w, axis=1)                    # (R, A)
    den = jnp.sum(ef, axis=1)                        # (R, A)
    # approx reciprocal ~1e-3 relative; fine for DFL box decoding.
    out = num * pl.reciprocal(den, approx=True)
    o_ref[...] = out.astype(o_ref.dtype)


def _tpu_generation():
    """Best-effort TPU generation (5/6/7); conservative default is 6."""
    try:
        kind = jax.devices()[0].device_kind.lower()
    except Exception:
        return 6
    for g in (7, 6, 5, 4):
        if f"v{g}" in kind:
            return g
    return 6


def _vmem_need_bytes(r_blk, a_blk, c1, itemsize, exp_itemsize):
    """Double-buffered in/out blocks + kernel-internal temporaries."""
    blk = r_blk * c1 * a_blk
    in_blk = blk * itemsize
    out_blk = r_blk * a_blk * itemsize
    # temporaries: x cast + e (exp_dtype), the f32 copy used for accumulation,
    # and the (R, A)-shaped f32 num/den/recip/out values.
    temps = blk * (2 * exp_itemsize + 4) + 4 * r_blk * a_blk * 4
    return 2 * (in_blk + out_blk) + temps


def dfl_forward(x, c1=16, a_tile=None, r_tile=32, exp_dtype=None):
    """x: (b, 4*c1, a) -> (b, 4, a), same dtype as the input."""
    b, c, a = x.shape
    assert c == 4 * c1, f"expected channels = 4*c1 = {4 * c1}, got {c}"
    assert r_tile % 8 == 0, "row tile must be a multiple of 8 (sublane-dense stores)"

    gen = _tpu_generation()
    itemsize = jnp.dtype(x.dtype).itemsize
    is_bf16 = x.dtype == jnp.bfloat16

    # exp front-end dtype: bf16 only on v7x with bf16 input (relieves the single
    # EUP/VALU at 3.2 TB/s); everywhere else the op is HBM-bound -> keep f32.
    if exp_dtype is None:
        exp_dtype = jnp.bfloat16 if (gen >= 7 and is_bf16) else jnp.float32
    exp_itemsize = jnp.dtype(exp_dtype).itemsize

    # VMEM cap with headroom under physical (128 MiB v5e/v6e, 64 MiB v7x).
    vmem_cap = (48 << 20) if gen >= 7 else (96 << 20)

    # Chip-aware default anchor tile (always a multiple of 128).
    if a_tile is None:
        if gen >= 7:
            a_tile = 4096 if is_bf16 else 2048
        else:
            a_tile = 16384 if is_bf16 else 8192
    assert a_tile % 128 == 0, "anchor tile must be lane-aligned (multiple of 128)"

    rows = 4 * b
    xr = x.reshape(rows, c1, a)
    r_blk = rows if rows < r_tile else r_tile        # full extent, or multiple of 8

    # Lane floor so each strided DMA row segment is >= ~2 KiB
    # (input block = r_blk*c1 strided segments of a_blk*itemsize each).
    min_blk = max(128, (2048 // itemsize // 128) * 128)   # 512 f32, 1024 bf16

    if a <= a_tile or a <= min_blk:
        a_blk = a                                     # full anchor extent, one tile
    else:
        a_blk = max(min_blk, a_tile)

    # v7x megacore: the anchor axis is the leading "parallel" axis; make sure it
    # has >= 2 tiles so both TensorCores get work (row tiles are typically 1).
    if gen >= 7 and a > 2 * min_blk:
        half = ((pl.cdiv(a, 2) + 127) // 128) * 128
        a_blk = min(a_blk, max(min_blk, half))

    # Shrink the anchor tile until the full budget (incl. f32 temporaries) fits.
    while (a_blk > min_blk
           and _vmem_need_bytes(r_blk, a_blk, c1, itemsize, exp_itemsize) > vmem_cap):
        new_blk = max(min_blk, ((a_blk // 2) // 128) * 128)
        if new_blk == a_blk:
            break
        a_blk = new_blk

    need = _vmem_need_bytes(r_blk, a_blk, c1, itemsize, exp_itemsize)
    vmem_limit = int(min(vmem_cap, max(32 << 20, need + (4 << 20))))

    grid = (pl.cdiv(a, a_blk), pl.cdiv(rows, r_blk))   # anchors lead (megacore)

    # Fixed integral weights 0..c1-1, passed as a tiny VMEM-resident constant
    # instead of rebuilding an iota constant every grid step.
    w = jnp.arange(c1, dtype=jnp.float32).reshape(1, c1, 1)

    out = pl.pallas_call(
        functools.partial(_dfl_kernel, exp_dtype=exp_dtype),
        out_shape=jax.ShapeDtypeStruct((rows, a), x.dtype),
        grid_spec=pltpu.PrefetchScalarGridSpec(
            num_scalar_prefetch=0,
            grid=grid,
            in_specs=[
                pl.BlockSpec((r_blk, c1, a_blk), lambda t, r: (r, 0, t)),
                pl.BlockSpec((1, c1, 1), lambda t, r: (0, 0, 0)),
            ],
            out_specs=pl.BlockSpec((r_blk, a_blk), lambda t, r: (r, t)),
        ),
        compiler_params=pltpu.CompilerParams(
            dimension_semantics=("parallel", "parallel"),
            vmem_limit_bytes=vmem_limit,
        ),
    )(xr, w)

    return out.reshape(b, 4, a)


def _dfl_ref(x, c1=16):
    # Pure-JAX reference mirroring the PyTorch module.
    b, c, a = x.shape
    xv = x.reshape(b, 4, c1, a).astype(jnp.float32)
    p = jax.nn.softmax(xv, axis=2)
    w = jnp.arange(c1, dtype=jnp.float32).reshape(1, 1, c1, 1)
    return jnp.sum(p * w, axis=2)                      # (b, 4, a)


if __name__ == "__main__":
    c1 = 16          # DFL default
    b, a = 2, 600    # small; a deliberately NOT a multiple of 128
    key = jax.random.PRNGKey(0)
    x = jax.random.normal(key, (b, 4 * c1, a), dtype=jnp.float32)

    # Default (chip-tuned) tiling, f32 path.
    y = jax.block_until_ready(dfl_forward(x, c1=c1))
    y_ref = _dfl_ref(x, c1=c1)
    assert y.shape == (b, 4, a)
    assert jnp.allclose(y, y_ref, atol=3e-2, rtol=1e-2)

    # Small requested anchor tile -> floored to the 512-lane DMA-segment
    # minimum, so a=600 exercises the 2-tile / masked-edge path.
    y2 = jax.block_until_ready(dfl_forward(x, c1=c1, a_tile=256))
    assert jnp.allclose(y2, y_ref, atol=3e-2, rtol=1e-2)

    # bf16 on the wire; exp front-end auto-selects bf16 only on v7x,
    # f32 accumulation always.
    xb = x.astype(jnp.bfloat16)
    yb = jax.block_until_ready(dfl_forward(xb, c1=c1))
    yb_ref = _dfl_ref(xb.astype(jnp.float32), c1=c1)
    assert yb.dtype == jnp.bfloat16
    assert jnp.allclose(yb.astype(jnp.float32), yb_ref, atol=2e-1, rtol=5e-2)

    print("KERNEL_OK")
</pallas_src>

<mosaic_0001>
module attributes {stable_mosaic.version = 11 : i64} {
  func.func @_dfl_kernel(%arg0: i32, %arg1: i32, %arg2: memref<8x16x600xf32, #tpu.memory_space<vmem>>, %arg3: memref<1x16x1xf32, #tpu.memory_space<vmem>>, %arg4: memref<8x600xf32, #tpu.memory_space<vmem>>) attributes {dimension_semantics = [#tpu.dimension_semantics<parallel>, #tpu.dimension_semantics<parallel>], iteration_bounds = array<i64: 1, 1>, scalar_prefetch = 0 : i64, scratch_operands = 0 : i64, tpu.core_type = #tpu.core_type<tc>, window_params = [{transform_indices = @transform_0, window_bounds = array<i64: 8, 16, 600>}, {pipeline_mode = #tpu.pipeline_mode<synchronous>, transform_indices = @transform_1, window_bounds = array<i64: 1, 16, 1>}, {transform_indices = @transform_2, window_bounds = array<i64: 8, 600>}]} {
    %c0 = arith.constant 0 : index
    %c0_0 = arith.constant 0 : index
    %c0_1 = arith.constant 0 : index
    %0 = vector.load %arg2[%c0, %c0_0, %c0_1] : memref<8x16x600xf32, #tpu.memory_space<vmem>>, vector<8x16x600xf32>
    %cst = arith.constant dense<0xFF800000> : vector<8x600xf32>
    %1 = vector.multi_reduction <maximumf>, %0, %cst [1] : vector<8x16x600xf32> to vector<8x600xf32>
    %2 = vector.shape_cast %1 : vector<8x600xf32> to vector<8x1x600xf32>
    %3 = vector.broadcast %2 : vector<8x1x600xf32> to vector<8x16x600xf32>
    %4 = arith.subf %0, %3 : vector<8x16x600xf32>
    %5 = math.exp %4 : vector<8x16x600xf32>
    %c0_2 = arith.constant 0 : index
    %c0_3 = arith.constant 0 : index
    %c0_4 = arith.constant 0 : index
    %6 = vector.load %arg3[%c0_2, %c0_3, %c0_4] : memref<1x16x1xf32, #tpu.memory_space<vmem>>, vector<1x16x1xf32>
    %7 = vector.broadcast %6 : vector<1x16x1xf32> to vector<8x16x600xf32>
    %8 = arith.mulf %5, %7 : vector<8x16x600xf32>
    %cst_5 = arith.constant dense<0.000000e+00> : vector<8x600xf32>
    %9 = vector.multi_reduction <add>, %8, %cst_5 [1] : vector<8x16x600xf32> to vector<8x600xf32>
    %cst_6 = arith.constant dense<0.000000e+00> : vector<8x600xf32>
    %10 = vector.multi_reduction <add>, %5, %cst_6 [1] : vector<8x16x600xf32> to vector<8x600xf32>
    %11 = tpu.reciprocal %10 {approx = true} : vector<8x600xf32> -> vector<8x600xf32>
    %12 = arith.mulf %9, %11 : vector<8x600xf32>
    %c0_7 = arith.constant 0 : index
    %c0_8 = arith.constant 0 : index
    %13 = vector.load %arg4[%c0_7, %c0_8] : memref<8x600xf32, #tpu.memory_space<vmem>>, vector<8x600xf32>
    tpu.vector_store %arg4[%c0_7, %c0_8], %12 {strides = array<i32>} : memref<8x600xf32, #tpu.memory_space<vmem>>, vector<8x600xf32>,
    return
  }
  func.func @transform_0(%arg0: i32, %arg1: i32) -> (i32, i32, i32) {
    %c0_i32 = arith.constant 0 : i32
    %c0_i32_0 = arith.constant 0 : i32
    return %arg1, %c0_i32, %arg0 : i32, i32, i32
  }
  func.func @transform_1(%arg0: i32, %arg1: i32) -> (i32, i32, i32) {
    %c0_i32 = arith.constant 0 : i32
    %c0_i32_0 = arith.constant 0 : i32
    %c0_i32_1 = arith.constant 0 : i32
    %c0_i32_2 = arith.constant 0 : i32
    return %c0_i32, %c0_i32_0, %c0_i32_1 : i32, i32, i32
  }
  func.func @transform_2(%arg0: i32, %arg1: i32) -> (i32, i32) {
    %c0_i32 = arith.constant 0 : i32
    return %arg1, %arg0 : i32, i32
  }
}

</mosaic_0001>

<llo_original>
// kernel: tpu_custom_call.1
$region0: #{tpu_custom_call.1}
  #allocation0 [shape = 'u32[]', space=smem, size = 0x4, offset = 0x4, fixed_abs, tag = 'smem constant byte address 0x4 - core index']
  #allocation1 [shape = 'u32[144,128]{1,0:T(1,128)}', space=vmem, size = 0x12000, scoped, tag = 'internal scratch']
  %s0 = inlined_call_operand.hbm [shape: f32[8,16,600], index: 0, kind: input, shape index: {}]
  %s1 = inlined_call_operand.vmem [shape: f32[1,16,1], index: 1, kind: input, shape index: {}]
  %s2 = inlined_call_operand.hbm [shape: f32[8,600], index: 2, kind: output, shape index: {}]
  %s3 = sld [smem:[#allocation0]]
  $region22: #{tpu_custom_call.1} parent=0
    _
  %s5 = ssub.s32 1, %s3
  %s6 = scalar_select 0, %s5, %s3
  $region1: #{tpu_custom_call.1} parent=0
    #allocation2 [shape = 'u8[327680]{0}', space=vmem, size = 0x50000, scoped, tag = 'input window, operand 0, single buffered']
    #allocation3 [shape = 's32[1]{0}', space=sflag, size = 0x4, scoped, tag = 'scoped memory for tpu_custom_call.1']
    #allocation4 [shape = 's32[1]{0}', space=sflag, size = 0x4, scoped, tag = 'scoped memory for tpu_custom_call.1']
    #allocation5 [shape = 'u8[20480]{0}', space=vmem, size = 0x5000, scoped, tag = 'output window, operand 0, single buffered']
    %7 = vsyncpa [#allocation3], 0
    %8 = vsyncpa [#allocation4], 0
    // Predicated region
    $region2: #{tpu_custom_call.1} parent=1 // pred_check
      _
    $region3: #{tpu_custom_call.1} parent=1 // pred_check_branch
      %10 = sbr.rel (0) target = $region5
    $region4: #{tpu_custom_call.1} parent=1 // pred_region
      %s12 = ssub.s32 10240, 10240
      %13 = vsyncadd [#allocation3], %s12
      %s14 = sshll.u32 [#allocation2], 4
      %s15 = int_to_ptr.vmem [resolvable:$true] %s14
      %20 = dma.hbm_to_vmem [thread:$0]  %s0, 10240, %s15, [#allocation3], 640, 640, 40
    $region5: #{tpu_custom_call.1} parent=1 // pred_fallthru
      _
    // Predicated region
    $region6: #{tpu_custom_call.1} parent=1 // pred_check
      _
    $region7: #{tpu_custom_call.1} parent=1 // pred_check_branch
      %22 = sbr.rel (0) target = $region9
    $region8: #{tpu_custom_call.1} parent=1 // pred_region
      _
    $region9: #{tpu_custom_call.1} parent=1 // pred_fallthru
      _
    // Predicated region
    $region10: #{tpu_custom_call.1} parent=1 // pred_check
      _
    $region11: #{tpu_custom_call.1} parent=1 // pred_check_branch
      %24 = sbr.rel (0) target = $region13
    $region12: #{tpu_custom_call.1} parent=1 // pred_region
      %25 = dma.done [#allocation3], 10240
    $region13: #{tpu_custom_call.1} parent=1 // pred_fallthru
      _
    %v26 = vld [vmem:[#allocation2] sm:$0xff]
    %v27 = vld [vmem:[#allocation2 + $0x8] sm:$0xff]
    %v28 = vld [vmem:[#allocation2 + $0x10] sm:$0xff]
    %v29 = vld [vmem:[#allocation2 + $0x18] sm:$0xff]
    %v30 = vld [vmem:[#allocation2 + $0x20] sm:$0xff]
    %v31 = vld [vmem:[#allocation2 + $0x28] sm:$0xff]
    %v32 = vld [vmem:[#allocation2 + $0x30] sm:$0xff]
    %v33 = vld [vmem:[#allocation2 + $0x38] sm:$0xff]
    %v34 = vld [vmem:[#allocation2 + $0x40] sm:$0xff]
    %v35 = vld [vmem:[#allocation2 + $0x48] sm:$0xff]
    %v36 = vld [vmem:[#allocation2 + $0x50] sm:$0xff]
    %v37 = vld [vmem:[#allocation2 + $0x58] sm:$0xff]
    %v38 = vld [vmem:[#allocation2 + $0x60] sm:$0xff]
    %v39 = vld [vmem:[#allocation2 + $0x68] sm:$0xff]
    %v40 = vld [vmem:[#allocation2 + $0x70] sm:$0xff]
    %v41 = vld [vmem:[#allocation2 + $0x78] sm:$0xff]
    %v42 = vld [vmem:[#allocation2 + $0x80] sm:$0xff]
    %v43 = vld [vmem:[#allocation2 + $0x88] sm:$0xff]
    %v44 = vld [vmem:[#allocation2 + $0x90] sm:$0xff]
    %v45 = vld [vmem:[#allocation2 + $0x98] sm:$0xff]
    %v46 = vld [vmem:[#allocation2 + $0xa0] sm:$0xff]
    %v47 = vld [vmem:[#allocation2 + $0xa8] sm:$0xff]
    %v48 = vld [vmem:[#allocation2 + $0xb0] sm:$0xff]
    %v49 = vld [vmem:[#allocation2 + $0xb8] sm:$0xff]
    %v50 = vld [vmem:[#allocation2 + $0xc0] sm:$0xff]
    %v51 = vld [vmem:[#allocation2 + $0xc8] sm:$0xff]
    %v52 = vld [vmem:[#allocation2 + $0xd0] sm:$0xff]
    %v53 = vld [vmem:[#allocation2 + $0xd8] sm:$0xff]
    %v54 = vld [vmem:[#allocation2 + $0xe0] sm:$0xff]
    %v55 = vld [vmem:[#allocation2 + $0xe8] sm:$0xff]
    %v56 = vld [vmem:[#allocation2 + $0xf0] sm:$0xff]
    %v57 = vld [vmem:[#allocation2 + $0xf8] sm:$0xff]
    %v58 = vld [vmem:[#allocation2 + $0x100] sm:$0xff]
    %v59 = vld [vmem:[#allocation2 + $0x108] sm:$0xff]
    %v60 = vld [vmem:[#allocation2 + $0x110] sm:$0xff]
    %v61 = vld [vmem:[#allocation2 + $0x118] sm:$0xff]
    %v62 = vld [vmem:[#allocation2 + $0x120] sm:$0xff]
    %v63 = vld [vmem:[#allocation2 + $0x128] sm:$0xff]
    %v64 = vld [vmem:[#allocation2 + $0x130] sm:$0xff]
    %v65 = vld [vmem:[#allocation2 + $0x138] sm:$0xff]
    %v66 = vld [vmem:[#allocation2 + $0x140] sm:$0xff]
    %v67 = vld [vmem:[#allocation2 + $0x148] sm:$0xff]
    %v68 = vld [vmem:[#allocation2 + $0x150] sm:$0xff]
    %v69 = vld [vmem:[#allocation2 + $0x158] sm:$0xff]
    %v70 = vld [vmem:[#allocation2 + $0x160] sm:$0xff]
    %v71 = vld [vmem:[#allocation2 + $0x168] sm:$0xff]
    %v72 = vld [vmem:[#allocation2 + $0x170] sm:$0xff]
    %v73 = vld [vmem:[#allocation2 + $0x178] sm:$0xff]
    %v74 = vld [vmem:[#allocation2 + $0x180] sm:$0xff]
    %v75 = vld [vmem:[#allocation2 + $0x188] sm:$0xff]
    %v76 = vld [vmem:[#allocation2 + $0x190] sm:$0xff]
    %v77 = vld [vmem:[#allocation2 + $0x198] sm:$0xff]
    %v78 = vld [vmem:[#allocation2 + $0x1a0] sm:$0xff]
    %v79 = vld [vmem:[#allocation2 + $0x1a8] sm:$0xff]
    %v80 = vld [vmem:[#allocation2 + $0x1b0] sm:$0xff]
    %v81 = vld [vmem:[#allocation2 + $0x1b8] sm:$0xff]
    %v82 = vld [vmem:[#allocation2 + $0x1c0] sm:$0xff]
    %v83 = vld [vmem:[#allocation2 + $0x1c8] sm:$0xff]
    %v84 = vld [vmem:[#allocation2 + $0x1d0] sm:$0xff]
    %v85 = vld [vmem:[#allocation2 + $0x1d8] sm:$0xff]
    %v86 = vld [vmem:[#allocation2 + $0x1e0] sm:$0xff]
    %v87 = vld [vmem:[#allocation2 + $0x1e8] sm:$0xff]
    %v88 = vld [vmem:[#allocation2 + $0x1f0] sm:$0xff]
    %v89 = vld [vmem:[#allocation2 + $0x1f8] sm:$0xff]
    %v90 = vld [vmem:[#allocation2 + $0x200] sm:$0xff]
    %v91 = vld [vmem:[#allocation2 + $0x208] sm:$0xff]
    %v92 = vld [vmem:[#allocation2 + $0x210] sm:$0xff]
    %v93 = vld [vmem:[#allocation2 + $0x218] sm:$0xff]
    %v94 = vld [vmem:[#allocation2 + $0x220] sm:$0xff]
    %v95 = vld [vmem:[#allocation2 + $0x228] sm:$0xff]
    %v96 = vld [vmem:[#allocation2 + $0x230] sm:$0xff]
    %v97 = vld [vmem:[#allocation2 + $0x238] sm:$0xff]
    %v98 = vld [vmem:[#allocation2 + $0x240] sm:$0xff]
    %v99 = vld [vmem:[#allocation2 + $0x248] sm:$0xff]
    %v100 = vld [vmem:[#allocation2 + $0x250] sm:$0xff]
    %v101 = vld [vmem:[#allocation2 + $0x258] sm:$0xff]
    %v102 = vld [vmem:[#allocation2 + $0x260] sm:$0xff]
    %v103 = vld [vmem:[#allocation2 + $0x268] sm:$0xff]
    %v104 = vld [vmem:[#allocation2 + $0x270] sm:$0xff]
    %v105 = vld [vmem:[#allocation2 + $0x278] sm:$0xff]
    %v106 = vmax.f32 %v26, %v31
    %v107 = vrot.slane %v106, 4
    %v108 = vmax.f32 %v106, %v107
    %v109 = vrot.slane %v108, 2
    %v110 = vmax.f32 %v108, %v109
    %v111 = vrot.slane %v110, 1
    %v112 = vmax.f32 %v110, %v111
    %v113 = vmax.f32 %v27, %v32
    %v114 = vrot.slane %v113, 4
    %v115 = vmax.f32 %v113, %v114
    %v116 = vrot.slane %v115, 2
    %v117 = vmax.f32 %v115, %v116
    %v118 = vrot.slane %v117, 1
    %v119 = vmax.f32 %v117, %v118
    %v120 = vmax.f32 %v28, %v33
    %v121 = vrot.slane %v120, 4
    %v122 = vmax.f32 %v120, %v121
    %v123 = vrot.slane %v122, 2
    %v124 = vmax.f32 %v122, %v123
    %v125 = vrot.slane %v124, 1
    %v126 = vmax.f32 %v124, %v125
    %v127 = vmax.f32 %v29, %v34
    %v128 = vrot.slane %v127, 4
    %v129 = vmax.f32 %v127, %v128
    %v130 = vrot.slane %v129, 2
    %v131 = vmax.f32 %v129, %v130
    %v132 = vrot.slane %v131, 1
    %v133 = vmax.f32 %v131, %v132
    %vm134 = vcmask 719872
    %v135 = vsel %vm134, %v30, -inf
    %v136 = vsel %vm134, %v35, -inf
    %v137 = vmax.f32 %v135, %v136
    %v138 = vrot.slane %v137, 4
    %v139 = vmax.f32 %v137, %v138
    %v140 = vrot.slane %v139, 2
    %v141 = vmax.f32 %v139, %v140
    %v142 = vrot.slane %v141, 1
    %v143 = vmax.f32 %v141, %v142
    %v144 = vmax.f32 %v36, %v41
    %v145 = vrot.slane %v144, 4
    %v146 = vmax.f32 %v144, %v145
    %v147 = vrot.slane %v146, 2
    %v148 = vmax.f32 %v146, %v147
    %v149 = vrot.slane %v148, 1
    %v150 = vmax.f32 %v148, %v149
    %v151 = vmax.f32 %v37, %v42
    %v152 = vrot.slane %v151, 4
    %v153 = vmax.f32 %v151, %v152
    %v154 = vrot.slane %v153, 2
    %v155 = vmax.f32 %v153, %v154
    %v156 = vrot.slane %v155, 1
    %v157 = vmax.f32 %v155, %v156
    %v158 = vmax.f32 %v38, %v43
    %v159 = vrot.slane %v158, 4
    %v160 = vmax.f32 %v158, %v159
    %v161 = vrot.slane %v160, 2
    %v162 = vmax.f32 %v160, %v161
    %v163 = vrot.slane %v162, 1
    %v164 = vmax.f32 %v162, %v163
    %v165 = vmax.f32 %v39, %v44
    %v166 = vrot.slane %v165, 4
    %v167 = vmax.f32 %v165, %v166
    %v168 = vrot.slane %v167, 2
    %v169 = vmax.f32 %v167, %v168
    %v170 = vrot.slane %v169, 1
    %v171 = vmax.f32 %v169, %v170
    %v172 = vsel %vm134, %v40, -inf
    %v173 = vsel %vm134, %v45, -inf
    %v174 = vmax.f32 %v172, %v173
    %v175 = vrot.slane %v174, 4
    %v176 = vmax.f32 %v174, %v175
    %v177 = vrot.slane %v176, 2
    %v178 = vmax.f32 %v176, %v177
    %v179 = vrot.slane %v178, 1
    %v180 = vmax.f32 %v178, %v179
    %v181 = vmax.f32 %v46, %v51
    %v182 = vrot.slane %v181, 4
    %v183 = vmax.f32 %v181, %v182
    %v184 = vrot.slane %v183, 2
    %v185 = vmax.f32 %v183, %v184
    %v186 = vrot.slane %v185, 1
    %v187 = vmax.f32 %v185, %v186
    %v188 = vmax.f32 %v47, %v52
    %v189 = vrot.slane %v188, 4
    %v190 = vmax.f32 %v188, %v189
    %v191 = vrot.slane %v190, 2
    %v192 = vmax.f32 %v190, %v191
    %v193 = vrot.slane %v192, 1
    %v194 = vmax.f32 %v192, %v193
    %v195 = vmax.f32 %v48, %v53
    %v196 = vrot.slane %v195, 4
    %v197 = vmax.f32 %v195, %v196
    %v198 = vrot.slane %v197, 2
    %v199 = vmax.f32 %v197, %v198
    %v200 = vrot.slane %v199, 1
    %v201 = vmax.f32 %v199, %v200
    %v202 = vmax.f32 %v49, %v54
    %v203 = vrot.slane %v202, 4
    %v204 = vmax.f32 %v202, %v203
    %v205 = vrot.slane %v204, 2
    %v206 = vmax.f32 %v204, %v205
    %v207 = vrot.slane %v206, 1
    %v208 = vmax.f32 %v206, %v207
    %v209 = vsel %vm134, %v50, -inf
    %v210 = vsel %vm134, %v55, -inf
    %v211 = vmax.f32 %v209, %v210
    %v212 = vrot.slane %v211, 4
    %v213 = vmax.f32 %v211, %v212
    %v214 = vrot.slane %v213, 2
    %v215 = vmax.f32 %v213, %v214
    %v216 = vrot.slane %v215, 1
    %v217 = vmax.f32 %v215, %v216
    %v218 = vmax.f32 %v56, %v61
    %v219 = vrot.slane %v218, 4
    %v220 = vmax.f32 %v218, %v219
    %v221 = vrot.slane %v220, 2
    %v222 = vmax.f32 %v220, %v221
    %v223 = vrot.slane %v222, 1
    %v224 = vmax.f32 %v222, %v223
    %v225 = vmax.f32 %v57, %v62
    %v226 = vrot.slane %v225, 4
    %v227 = vmax.f32 %v225, %v226
    %v228 = vrot.slane %v227, 2
    %v229 = vmax.f32 %v227, %v228
    %v230 = vrot.slane %v229, 1
    %v231 = vmax.f32 %v229, %v230
    %v232 = vmax.f32 %v58, %v63
    %v233 = vrot.slane %v232, 4
    %v234 = vmax.f32 %v232, %v233
    %v235 = vrot.slane %v234, 2
    %v236 = vmax.f32 %v234, %v235
    %v237 = vrot.slane %v236, 1
    %v238 = vmax.f32 %v236, %v237
    %v239 = vmax.f32 %v59, %v64
    %v240 = vrot.slane %v239, 4
    %v241 = vmax.f32 %v239, %v240
    %v242 = vrot.slane %v241, 2
    %v243 = vmax.f32 %v241, %v242
    %v244 = vrot.slane %v243, 1
    %v245 = vmax.f32 %v243, %v244
    %v246 = vsel %vm134, %v60, -inf
    %v247 = vsel %vm134, %v65, -inf
    %v248 = vmax.f32 %v246, %v247
    %v249 = vrot.slane %v248, 4
    %v250 = vmax.f32 %v248, %v249
    %v251 = vrot.slane %v250, 2
    %v252 = vmax.f32 %v250, %v251
    %v253 = vrot.slane %v252, 1
    %v254 = vmax.f32 %v252, %v253
    %v255 = vmax.f32 %v66, %v71
    %v256 = vrot.slane %v255, 4
    %v257 = vmax.f32 %v255, %v256
    %v258 = vrot.slane %v257, 2
    %v259 = vmax.f32 %v257, %v258
    %v260 = vrot.slane %v259, 1
    %v261 = vmax.f32 %v259, %v260
    %v262 = vmax.f32 %v67, %v72
    %v263 = vrot.slane %v262, 4
    %v264 = vmax.f32 %v262, %v263
    %v265 = vrot.slane %v264, 2
    %v266 = vmax.f32 %v264, %v265
    %v267 = vrot.slane %v266, 1
    %v268 = vmax.f32 %v266, %v267
    %v269 = vmax.f32 %v68, %v73
    %v270 = vrot.slane %v269, 4
    %v271 = vmax.f32 %v269, %v270
    %v272 = vrot.slane %v271, 2
    %v273 = vmax.f32 %v271, %v272
    %v274 = vrot.slane %v273, 1
    %v275 = vmax.f32 %v273, %v274
    %v276 = vmax.f32 %v69, %v74
    %v277 = vrot.slane %v276, 4
    %v278 = vmax.f32 %v276, %v277
    %v279 = vrot.slane %v278, 2
    %v280 = vmax.f32 %v278, %v279
    %v281 = vrot.slane %v280, 1
    %v282 = vmax.f32 %v280, %v281
    %v283 = vsel %vm134, %v70, -inf
    %v284 = vsel %vm134, %v75, -inf
    %v285 = vmax.f32 %v283, %v284
    %v286 = vrot.slane %v285, 4
    %v287 = vmax.f32 %v285, %v286
    %v288 = vrot.slane %v287, 2
    %v289 = vmax.f32 %v287, %v288
    %v290 = vrot.slane %v289, 1
    %v291 = vmax.f32 %v289, %v290
    %v292 = vmax.f32 %v76, %v81
    %v293 = vrot.slane %v292, 4
    %v294 = vmax.f32 %v292, %v293
    %v295 = vrot.slane %v294, 2
    %v296 = vmax.f32 %v294, %v295
    %v297 = vrot.slane %v296, 1
    %v298 = vmax.f32 %v296, %v297
    %v299 = vmax.f32 %v77, %v82
    %v300 = vrot.slane %v299, 4
    %v301 = vmax.f32 %v299, %v300
    %v302 = vrot.slane %v301, 2
    %v303 = vmax.f32 %v301, %v302
    %v304 = vrot.slane %v303, 1
    %v305 = vmax.f32 %v303, %v304
    %v306 = vmax.f32 %v78, %v83
    %v307 = vrot.slane %v306, 4
    %v308 = vmax.f32 %v306, %v307
    %v309 = vrot.slane %v308, 2
    %v310 = vmax.f32 %v308, %v309
    %v311 = vrot.slane %v310, 1
    %v312 = vmax.f32 %v310, %v311
    %v313 = vmax.f32 %v79, %v84
    %v314 = vrot.slane %v313, 4
    %v315 = vmax.f32 %v313, %v314
    %v316 = vrot.slane %v315, 2
    %v317 = vmax.f32 %v315, %v316
    %v318 = vrot.slane %v317, 1
    %v319 = vmax.f32 %v317, %v318
    %v320 = vsel %vm134, %v80, -inf
    %v321 = vsel %vm134, %v85, -inf
    %v322 = vmax.f32 %v320, %v321
    %v323 = vrot.slane %v322, 4
    %v324 = vmax.f32 %v322, %v323
    %v325 = vrot.slane %v324, 2
    %v326 = vmax.f32 %v324, %v325
    %v327 = vrot.slane %v326, 1
    %v328 = vmax.f32 %v326, %v327
    %v329 = vmax.f32 %v86, %v91
    %v330 = vrot.slane %v329, 4
    %v331 = vmax.f32 %v329, %v330
    %v332 = vrot.slane %v331, 2
    %v333 = vmax.f32 %v331, %v332
    %v334 = vrot.slane %v333, 1
    %v335 = vmax.f32 %v333, %v334
    %v336 = vmax.f32 %v87, %v92
    %v337 = vrot.slane %v336, 4
    %v338 = vmax.f32 %v336, %v337
    %v339 = vrot.slane %v338, 2
    %v340 = vmax.f32 %v338, %v339
    %v341 = vrot.slane %v340, 1
    %v342 = vmax.f32 %v340, %v341
    %v343 = vmax.f32 %v88, %v93
    %v344 = vrot.slane %v343, 4
    %v345 = vmax.f32 %v343, %v344
    %v346 = vrot.slane %v345, 2
    %v347 = vmax.f32 %v345, %v346
    %v348 = vrot.slane %v347, 1
    %v349 = vmax.f32 %v347, %v348
    %v350 = vmax.f32 %v89, %v94
    %v351 = vrot.slane %v350, 4
    %v352 = vmax.f32 %v350, %v351
    %v353 = vrot.slane %v352, 2
    %v354 = vmax.f32 %v352, %v353
    %v355 = vrot.slane %v354, 1
    %v356 = vmax.f32 %v354, %v355
    %v357 = vsel %vm134, %v90, -inf
    %v358 = vsel %vm134, %v95, -inf
    %v359 = vmax.f32 %v357, %v358
    %v360 = vrot.slane %v359, 4
    %v361 = vmax.f32 %v359, %v360
    %v362 = vrot.slane %v361, 2
    %v363 = vmax.f32 %v361, %v362
    %v364 = vrot.slane %v363, 1
    %v365 = vmax.f32 %v363, %v364
    %v366 = vmax.f32 %v96, %v101
    %v367 = vrot.slane %v366, 4
    %v368 = vmax.f32 %v366, %v367
    %v369 = vrot.slane %v368, 2
    %v370 = vmax.f32 %v368, %v369
    %v371 = vrot.slane %v370, 1
    %v372 = vmax.f32 %v370, %v371
    %v373 = vmax.f32 %v97, %v102
    %v374 = vrot.slane %v373, 4
    %v375 = vmax.f32 %v373, %v374
    %v376 = vrot.slane %v375, 2
    %v377 = vmax.f32 %v375, %v376
    %v378 = vrot.slane %v377, 1
    %v379 = vmax.f32 %v377, %v378
    %v380 = vmax.f32 %v98, %v103
    %v381 = vrot.slane %v380, 4
    %v382 = vmax.f32 %v380, %v381
    %v383 = vrot.slane %v382, 2
    %v384 = vmax.f32 %v382, %v383
    %v385 = vrot.slane %v384, 1
    %v386 = vmax.f32 %v384, %v385
    %v387 = vmax.f32 %v99, %v104
    %v388 = vrot.slane %v387, 4
    %v389 = vmax.f32 %v387, %v388
    %v390 = vrot.slane %v389, 2
    %v391 = vmax.f32 %v389, %v390
    %v392 = vrot.slane %v391, 1
    %v393 = vmax.f32 %v391, %v392
    %v394 = vsel %vm134, %v100, -inf
    %v395 = vsel %vm134, %v105, -inf
    %v396 = vmax.f32 %v394, %v395
    %v397 = vrot.slane %v396, 4
    %v398 = vmax.f32 %v396, %v397
    %v399 = vrot.slane %v398, 2
    %v400 = vmax.f32 %v398, %v399
    %v401 = vrot.slane %v400, 1
    %v402 = vmax.f32 %v400, %v401
    %v403 = vsub.f32 %v26, %v112
    %v404 = vsub.f32 %v27, %v119
    %v405 = vsub.f32 %v28, %v126
    %v406 = vsub.f32 %v29, %v133
    %v407 = vsub.f32 %v30, %v143
    %v408 = vsub.f32 %v31, %v112
    %v409 = vsub.f32 %v32, %v119
    %v410 = vsub.f32 %v33, %v126
    %v411 = vsub.f32 %v34, %v133
    %v412 = vsub.f32 %v35, %v143
    %v413 = vsub.f32 %v36, %v150
    %v414 = vsub.f32 %v37, %v157
    %v415 = vsub.f32 %v38, %v164
    %v416 = vsub.f32 %v39, %v171
    %v417 = vsub.f32 %v40, %v180
    %v418 = vsub.f32 %v41, %v150
    %v419 = vsub.f32 %v42, %v157
    %v420 = vsub.f32 %v43, %v164
    %v421 = vsub.f32 %v44, %v171
    %v422 = vsub.f32 %v45, %v180
    %v423 = vsub.f32 %v46, %v187
    %v424 = vsub.f32 %v47, %v194
    %v425 = vsub.f32 %v48, %v201
    %v426 = vsub.f32 %v49, %v208
    %v427 = vsub.f32 %v50, %v217
    %v428 = vsub.f32 %v51, %v187
    %v429 = vsub.f32 %v52, %v194
    %v430 = vsub.f32 %v53, %v201
    %v431 = vsub.f32 %v54, %v208
    %v432 = vsub.f32 %v55, %v217
    %v433 = vsub.f32 %v56, %v224
    %v434 = vsub.f32 %v57, %v231
    %v435 = vsub.f32 %v58, %v238
    %v436 = vsub.f32 %v59, %v245
    %v437 = vsub.f32 %v60, %v254
    %v438 = vsub.f32 %v61, %v224
    %v439 = vsub.f32 %v62, %v231
    %v440 = vsub.f32 %v63, %v238
    %v441 = vsub.f32 %v64, %v245
    %v442 = vsub.f32 %v65, %v254
    %v443 = vsub.f32 %v66, %v261
    %v444 = vsub.f32 %v67, %v268
    %v445 = vsub.f32 %v68, %v275
    %v446 = vsub.f32 %v69, %v282
    %v447 = vsub.f32 %v70, %v291
    %v448 = vsub.f32 %v71, %v261
    %v449 = vsub.f32 %v72, %v268
    %v450 = vsub.f32 %v73, %v275
    %v451 = vsub.f32 %v74, %v282
    %v452 = vsub.f32 %v75, %v291
    %v453 = vsub.f32 %v76, %v298
    %v454 = vsub.f32 %v77, %v305
    %v455 = vsub.f32 %v78, %v312
    %v456 = vsub.f32 %v79, %v319
    %v457 = vsub.f32 %v80, %v328
    %v458 = vsub.f32 %v81, %v298
    %v459 = vsub.f32 %v82, %v305
    %v460 = vsub.f32 %v83, %v312
    %v461 = vsub.f32 %v84, %v319
    %v462 = vsub.f32 %v85, %v328
    %v463 = vsub.f32 %v86, %v335
    %v464 = vsub.f32 %v87, %v342
    %v465 = vsub.f32 %v88, %v349
    %v466 = vsub.f32 %v89, %v356
    %v467 = vsub.f32 %v90, %v365
    %v468 = vsub.f32 %v91, %v335
    %v469 = vsub.f32 %v92, %v342
    %v470 = vsub.f32 %v93, %v349
    %v471 = vsub.f32 %v94, %v356
    %v472 = vsub.f32 %v95, %v365
    %v473 = vsub.f32 %v96, %v372
    %v474 = vsub.f32 %v97, %v379
    %v475 = vsub.f32 %v98, %v386
    %v476 = vsub.f32 %v99, %v393
    %v477 = vsub.f32 %v100, %v402
    %v478 = vsub.f32 %v101, %v372
    %v479 = vsub.f32 %v102, %v379
    %v480 = vsub.f32 %v103, %v386
    %v481 = vsub.f32 %v104, %v393
    %v482 = vsub.f32 %v105, %v402
    %v483 = vmul.f32 %v403, 1.442695
    %v484 = vpow.pop %v483
    %v485 = vmul.f32 %v404, 1.442695
    %v486 = vpow.pop %v485
    %v487 = vmul.f32 %v405, 1.442695
    %v488 = vpow.pop %v487
    %v489 = vmul.f32 %v406, 1.442695
    %v490 = vpow.pop %v489
    %v491 = vmul.f32 %v407, 1.442695
    %v492 = vpow.pop %v491
    %v493 = vmul.f32 %v408, 1.442695
    %v494 = vpow.pop %v493
    %v495 = vmul.f32 %v409, 1.442695
    %v496 = vpow.pop %v495
    %v497 = vmul.f32 %v410, 1.442695
    %v498 = vpow.pop %v497
    %v499 = vmul.f32 %v411, 1.442695
    %v500 = vpow.pop %v499
    %v501 = vmul.f32 %v412, 1.442695
    %v502 = vpow.pop %v501
    %v503 = vmul.f32 %v413, 1.442695
    %v504 = vpow.pop %v503
    %v505 = vmul.f32 %v414, 1.442695
    %v506 = vpow.pop %v505
    %v507 = vmul.f32 %v415, 1.442695
    %v508 = vpow.pop %v507
    %v509 = vmul.f32 %v416, 1.442695
    %v510 = vpow.pop %v509
    %v511 = vmul.f32 %v417, 1.442695
    %v512 = vpow.pop %v511
    %v513 = vmul.f32 %v418, 1.442695
    %v514 = vpow.pop %v513
    %v515 = vmul.f32 %v419, 1.442695
    %v516 = vpow.pop %v515
    %v517 = vmul.f32 %v420, 1.442695
    %v518 = vpow.pop %v517
    %v519 = vmul.f32 %v421, 1.442695
    %v520 = vpow.pop %v519
    %v521 = vmul.f32 %v422, 1.442695
    %v522 = vpow.pop %v521
    %v523 = vmul.f32 %v423, 1.442695
    %v524 = vpow.pop %v523
    %v525 = vmul.f32 %v424, 1.442695
    %v526 = vpow.pop %v525
    %v527 = vmul.f32 %v425, 1.442695
    %v528 = vpow.pop %v527
    %v529 = vmul.f32 %v426, 1.442695
    %v530 = vpow.pop %v529
    %v531 = vmul.f32 %v427, 1.442695
    %v532 = vpow.pop %v531
    %v533 = vmul.f32 %v428, 1.442695
    %v534 = vpow.pop %v533
    %v535 = vmul.f32 %v429, 1.442695
    %v536 = vpow.pop %v535
    %v537 = vmul.f32 %v430, 1.442695
    %v538 = vpow.pop %v537
    %v539 = vmul.f32 %v431, 1.442695
    %v540 = vpow.pop %v539
    %v541 = vmul.f32 %v432, 1.442695
    %v542 = vpow.pop %v541
    %v543 = vmul.f32 %v433, 1.442695
    %v544 = vpow.pop %v543
    %v545 = vmul.f32 %v434, 1.442695
    %v546 = vpow.pop %v545
    %v547 = vmul.f32 %v435, 1.442695
    %v548 = vpow.pop %v547
    %v549 = vmul.f32 %v436, 1.442695
    %v550 = vpow.pop %v549
    %v551 = vmul.f32 %v437, 1.442695
    %v552 = vpow.pop %v551
    %v553 = vmul.f32 %v438, 1.442695
    %v554 = vpow.pop %v553
    %v555 = vmul.f32 %v439, 1.442695
    %v556 = vpow.pop %v555
    %v557 = vmul.f32 %v440, 1.442695
    %v558 = vpow.pop %v557
    %v559 = vmul.f32 %v441, 1.442695
    %v560 = vpow.pop %v559
    %v561 = vmul.f32 %v442, 1.442695
    %v562 = vpow.pop %v561
    %v563 = vmul.f32 %v443, 1.442695
    %v564 = vpow.pop %v563
    %v565 = vmul.f32 %v444, 1.442695
    %v566 = vpow.pop %v565
    %v567 = vmul.f32 %v445, 1.442695
    %v568 = vpow.pop %v567
    %v569 = vmul.f32 %v446, 1.442695
    %v570 = vpow.pop %v569
    %v571 = vmul.f32 %v447, 1.442695
    %v572 = vpow.pop %v571
    %v573 = vmul.f32 %v448, 1.442695
    %v574 = vpow.pop %v573
    %v575 = vmul.f32 %v449, 1.442695
    %v576 = vpow.pop %v575
    %v577 = vmul.f32 %v450, 1.442695
    %v578 = vpow.pop %v577
    %v579 = vmul.f32 %v451, 1.442695
    %v580 = vpow.pop %v579
    %v581 = vmul.f32 %v452, 1.442695
    %v582 = vpow.pop %v581
    %v583 = vmul.f32 %v453, 1.442695
    %v584 = vpow.pop %v583
    %v585 = vmul.f32 %v454, 1.442695
    %v586 = vpow.pop %v585
    %v587 = vmul.f32 %v455, 1.442695
    %v588 = vpow.pop %v587
    %v589 = vmul.f32 %v456, 1.442695
    %v590 = vpow.pop %v589
    %v591 = vmul.f32 %v457, 1.442695
    %v592 = vpow.pop %v591
    %v593 = vmul.f32 %v458, 1.442695
    %v594 = vpow.pop %v593
    %v595 = vmul.f32 %v459, 1.442695
    %v596 = vpow.pop %v595
    %v597 = vmul.f32 %v460, 1.442695
    %v598 = vpow.pop %v597
    %v599 = vmul.f32 %v461, 1.442695
    %v600 = vpow.pop %v599
    %v601 = vmul.f32 %v462, 1.442695
    %v602 = vpow.pop %v601
    %v603 = vmul.f32 %v463, 1.442695
    %v604 = vpow.pop %v603
    %v605 = vmul.f32 %v464, 1.442695
    %v606 = vpow.pop %v605
    %v607 = vmul.f32 %v465, 1.442695
    %v608 = vpow.pop %v607
    %v609 = vmul.f32 %v466, 1.442695
    %v610 = vpow.pop %v609
    %v611 = vmul.f32 %v467, 1.442695
    %v612 = vpow.pop %v611
    %v613 = vmul.f32 %v468, 1.442695
    %v614 = vpow.pop %v613
    %v615 = vmul.f32 %v469, 1.442695
    %v616 = vpow.pop %v615
    %v617 = vmul.f32 %v470, 1.442695
    %v618 = vpow.pop %v617
    %v619 = vmul.f32 %v471, 1.442695
    %v620 = vpow.pop %v619
    %v621 = vmul.f32 %v472, 1.442695
    %v622 = vpow.pop %v621
    %v623 = vmul.f32 %v473, 1.442695
    %v624 = vpow.pop %v623
    %v625 = vmul.f32 %v474, 1.442695
    %v626 = vpow.pop %v625
    %v627 = vmul.f32 %v475, 1.442695
    %v628 = vpow.pop %v627
    %v629 = vmul.f32 %v476, 1.442695
    %v630 = vpow.pop %v629
    %v631 = vmul.f32 %v477, 1.442695
    %v632 = vpow.pop %v631
    %v633 = vmul.f32 %v478, 1.442695
    %v634 = vpow.pop %v633
    %v635 = vmul.f32 %v479, 1.442695
    %v636 = vpow.pop %v635
    %v637 = vmul.f32 %v480, 1.442695
    %v638 = vpow.pop %v637
    %v639 = vmul.f32 %v481, 1.442695
    %v640 = vpow.pop %v639
    %v641 = vmul.f32 %v482, 1.442695
    %v642 = vpow.pop %v641
    %v643 = vld [vmem:[%s1] sm:$0xff]
    %v644 = vld [vmem:[%s1 + $0x8] sm:$0xff]
    %646 = vset.pattern.permute.xlu0 0
    %647 = vperm.xlu0 %646, %v643
    %v648 = vpop.permute.xlu0 %647
    %651 = vset.pattern.permute.xlu0 0
    %652 = vperm.xlu0 %651, %v644
    %v653 = vpop.permute.xlu0 %652
    %v655 = vmul.f32 %v484, %v648
    %v656 = vmul.f32 %v486, %v648
    %v657 = vmul.f32 %v488, %v648
    %v658 = vmul.f32 %v490, %v648
    %v659 = vmul.f32 %v492, %v648
    %v660 = vmul.f32 %v494, %v653
    %v661 = vmul.f32 %v496, %v653
    %v662 = vmul.f32 %v498, %v653
    %v663 = vmul.f32 %v500, %v653
    %v664 = vmul.f32 %v502, %v653
    %v665 = vmul.f32 %v504, %v648
    %v666 = vmul.f32 %v506, %v648
    %v667 = vmul.f32 %v508, %v648
    %v668 = vmul.f32 %v510, %v648
    %v669 = vmul.f32 %v512, %v648
    %v670 = vmul.f32 %v514, %v653
    %v671 = vmul.f32 %v516, %v653
    %v672 = vmul.f32 %v518, %v653
    %v673 = vmul.f32 %v520, %v653
    %v674 = vmul.f32 %v522, %v653
    %v675 = vmul.f32 %v524, %v648
    %v676 = vmul.f32 %v526, %v648
    %v677 = vmul.f32 %v528, %v648
    %v678 = vmul.f32 %v530, %v648
    %v679 = vmul.f32 %v532, %v648
    %v680 = vmul.f32 %v534, %v653
    %v681 = vmul.f32 %v536, %v653
    %v682 = vmul.f32 %v538, %v653
    %v683 = vmul.f32 %v540, %v653
    %v684 = vmul.f32 %v542, %v653
    %v685 = vmul.f32 %v544, %v648
    %v686 = vmul.f32 %v546, %v648
    %v687 = vmul.f32 %v548, %v648
    %v688 = vmul.f32 %v550, %v648
    %v689 = vmul.f32 %v552, %v648
    %v690 = vmul.f32 %v554, %v653
    %v691 = vmul.f32 %v556, %v653
    %v692 = vmul.f32 %v558, %v653
    %v693 = vmul.f32 %v560, %v653
    %v694 = vmul.f32 %v562, %v653
    %v695 = vmul.f32 %v564, %v648
    %v696 = vmul.f32 %v566, %v648
    %v697 = vmul.f32 %v568, %v648
    %v698 = vmul.f32 %v570, %v648
    %v699 = vmul.f32 %v572, %v648
    %v700 = vmul.f32 %v574, %v653
    %v701 = vmul.f32 %v576, %v653
    %v702 = vmul.f32 %v578, %v653
    %v703 = vmul.f32 %v580, %v653
    %v704 = vmul.f32 %v582, %v653
    %v705 = vmul.f32 %v584, %v648
    %v706 = vmul.f32 %v586, %v648
    %v707 = vmul.f32 %v588, %v648
    %v708 = vmul.f32 %v590, %v648
    %v709 = vmul.f32 %v592, %v648
    %v710 = vmul.f32 %v594, %v653
    %v711 = vmul.f32 %v596, %v653
    %v712 = vmul.f32 %v598, %v653
    %v713 = vmul.f32 %v600, %v653
    %v714 = vmul.f32 %v602, %v653
    %v715 = vmul.f32 %v604, %v648
    %v716 = vmul.f32 %v606, %v648
    %v717 = vmul.f32 %v608, %v648
    %v718 = vmul.f32 %v610, %v648
    %v719 = vmul.f32 %v612, %v648
    %v720 = vmul.f32 %v614, %v653
    %v721 = vmul.f32 %v616, %v653
    %v722 = vmul.f32 %v618, %v653
    %v723 = vmul.f32 %v620, %v653
    %v724 = vmul.f32 %v622, %v653
    %v725 = vmul.f32 %v624, %v648
    %v726 = vmul.f32 %v626, %v648
    %v727 = vmul.f32 %v628, %v648
    %v728 = vmul.f32 %v630, %v648
    %v729 = vmul.f32 %v632, %v648
    %v730 = vmul.f32 %v634, %v653
    %v731 = vmul.f32 %v636, %v653
    %v732 = vmul.f32 %v638, %v653
    %v733 = vmul.f32 %v640, %v653
    %v734 = vmul.f32 %v642, %v653
    %v735 = vadd.f32 %v655, %v660
    %v736 = vrot.slane %v735, 4
    %v737 = vadd.f32 %v735, %v736
    %v738 = vrot.slane %v737, 2
    %v739 = vadd.f32 %v737, %v738
    %v740 = vrot.slane %v739, 1
    %v741 = vadd.f32 %v739, %v740
    %v742 = vadd.f32 %v656, %v661
    %v743 = vrot.slane %v742, 4
    %v744 = vadd.f32 %v742, %v743
    %v745 = vrot.slane %v744, 2
    %v746 = vadd.f32 %v744, %v745
    %v747 = vrot.slane %v746, 1
    %v748 = vadd.f32 %v746, %v747
    %v749 = vadd.f32 %v657, %v662
    %v750 = vrot.slane %v749, 4
    %v751 = vadd.f32 %v749, %v750
    %v752 = vrot.slane %v751, 2
    %v753 = vadd.f32 %v751, %v752
    %v754 = vrot.slane %v753, 1
    %v755 = vadd.f32 %v753, %v754
    %v756 = vadd.f32 %v658, %v663
    %v757 = vrot.slane %v756, 4
    %v758 = vadd.f32 %v756, %v757
    %v759 = vrot.slane %v758, 2
    %v760 = vadd.f32 %v758, %v759
    %v761 = vrot.slane %v760, 1
    %v762 = vadd.f32 %v760, %v761
    %v763 = vsel %vm134, %v659, 0.0
    %v764 = vsel %vm134, %v664, 0.0
    %v765 = vadd.f32 %v763, %v764
    %v766 = vrot.slane %v765, 4
    %v767 = vadd.f32 %v765, %v766
    %v768 = vrot.slane %v767, 2
    %v769 = vadd.f32 %v767, %v768
    %v770 = vrot.slane %v769, 1
    %v771 = vadd.f32 %v769, %v770
    %v772 = vadd.f32 %v665, %v670
    %v773 = vrot.slane %v772, 4
    %v774 = vadd.f32 %v772, %v773
    %v775 = vrot.slane %v774, 2
    %v776 = vadd.f32 %v774, %v775
    %v777 = vrot.slane %v776, 1
    %v778 = vadd.f32 %v776, %v777
    %v779 = vadd.f32 %v666, %v671
    %v780 = vrot.slane %v779, 4
    %v781 = vadd.f32 %v779, %v780
    %v782 = vrot.slane %v781, 2
    %v783 = vadd.f32 %v781, %v782
    %v784 = vrot.slane %v783, 1
    %v785 = vadd.f32 %v783, %v784
    %v786 = vadd.f32 %v667, %v672
    %v787 = vrot.slane %v786, 4
    %v788 = vadd.f32 %v786, %v787
    %v789 = vrot.slane %v788, 2
    %v790 = vadd.f32 %v788, %v789
    %v791 = vrot.slane %v790, 1
    %v792 = vadd.f32 %v790, %v791
    %v793 = vadd.f32 %v668, %v673
    %v794 = vrot.slane %v793, 4
    %v795 = vadd.f32 %v793, %v794
    %v796 = vrot.slane %v795, 2
    %v797 = vadd.f32 %v795, %v796
    %v798 = vrot.slane %v797, 1
    %v799 = vadd.f32 %v797, %v798
    %v800 = vsel %vm134, %v669, 0.0
    %v801 = vsel %vm134, %v674, 0.0
    %v802 = vadd.f32 %v800, %v801
    %v803 = vrot.slane %v802, 4
    %v804 = vadd.f32 %v802, %v803
    %v805 = vrot.slane %v804, 2
    %v806 = vadd.f32 %v804, %v805
    %v807 = vrot.slane %v806, 1
    %v808 = vadd.f32 %v806, %v807
    %v809 = vadd.f32 %v675, %v680
    %v810 = vrot.slane %v809, 4
    %v811 = vadd.f32 %v809, %v810
    %v812 = vrot.slane %v811, 2
    %v813 = vadd.f32 %v811, %v812
    %v814 = vrot.slane %v813, 1
    %v815 = vadd.f32 %v813, %v814
    %v816 = vadd.f32 %v676, %v681
    %v817 = vrot.slane %v816, 4
    %v818 = vadd.f32 %v816, %v817
    %v819 = vrot.slane %v818, 2
    %v820 = vadd.f32 %v818, %v819
    %v821 = vrot.slane %v820, 1
    %v822 = vadd.f32 %v820, %v821
    %v823 = vadd.f32 %v677, %v682
    %v824 = vrot.slane %v823, 4
    %v825 = vadd.f32 %v823, %v824
    %v826 = vrot.slane %v825, 2
    %v827 = vadd.f32 %v825, %v826
    %v828 = vrot.slane %v827, 1
    %v829 = vadd.f32 %v827, %v828
    %v830 = vadd.f32 %v678, %v683
    %v831 = vrot.slane %v830, 4
    %v832 = vadd.f32 %v830, %v831
    %v833 = vrot.slane %v832, 2
    %v834 = vadd.f32 %v832, %v833
    %v835 = vrot.slane %v834, 1
    %v836 = vadd.f32 %v834, %v835
    %v837 = vsel %vm134, %v679, 0.0
    %v838 = vsel %vm134, %v684, 0.0
    %v839 = vadd.f32 %v837, %v838
    %v840 = vrot.slane %v839, 4
    %v841 = vadd.f32 %v839, %v840
    %v842 = vrot.slane %v841, 2
    %v843 = vadd.f32 %v841, %v842
    %v844 = vrot.slane %v843, 1
    %v845 = vadd.f32 %v843, %v844
    %v846 = vadd.f32 %v685, %v690
    %v847 = vrot.slane %v846, 4
    %v848 = vadd.f32 %v846, %v847
    %v849 = vrot.slane %v848, 2
    %v850 = vadd.f32 %v848, %v849
    %v851 = vrot.slane %v850, 1
    %v852 = vadd.f32 %v850, %v851
    %v853 = vadd.f32 %v686, %v691
    %v854 = vrot.slane %v853, 4
    %v855 = vadd.f32 %v853, %v854
    %v856 = vrot.slane %v855, 2
    %v857 = vadd.f32 %v855, %v856
    %v858 = vrot.slane %v857, 1
    %v859 = vadd.f32 %v857, %v858
    %v860 = vadd.f32 %v687, %v692
    %v861 = vrot.slane %v860, 4
    %v862 = vadd.f32 %v860, %v861
    %v863 = vrot.slane %v862, 2
    %v864 = vadd.f32 %v862, %v863
    %v865 = vrot.slane %v864, 1
    %v866 = vadd.f32 %v864, %v865
    %v867 = vadd.f32 %v688, %v693
    %v868 = vrot.slane %v867, 4
    %v869 = vadd.f32 %v867, %v868
    %v870 = vrot.slane %v869, 2
    %v871 = vadd.f32 %v869, %v870
    %v872 = vrot.slane %v871, 1
    %v873 = vadd.f32 %v871, %v872
    %v874 = vsel %vm134, %v689, 0.0
    %v875 = vsel %vm134, %v694, 0.0
    %v876 = vadd.f32 %v874, %v875
    %v877 = vrot.slane %v876, 4
    %v878 = vadd.f32 %v876, %v877
    %v879 = vrot.slane %v878, 2
    %v880 = vadd.f32 %v878, %v879
    %v881 = vrot.slane %v880, 1
    %v882 = vadd.f32 %v880, %v881
    %v883 = vadd.f32 %v695, %v700
    %v884 = vrot.slane %v883, 4
    %v885 = vadd.f32 %v883, %v884
    %v886 = vrot.slane %v885, 2
    %v887 = vadd.f32 %v885, %v886
    %v888 = vrot.slane %v887, 1
    %v889 = vadd.f32 %v887, %v888
    %v890 = vadd.f32 %v696, %v701
    %v891 = vrot.slane %v890, 4
    %v892 = vadd.f32 %v890, %v891
    %v893 = vrot.slane %v892, 2
    %v894 = vadd.f32 %v892, %v893
    %v895 = vrot.slane %v894, 1
    %v896 = vadd.f32 %v894, %v895
    %v897 = vadd.f32 %v697, %v702
    %v898 = vrot.slane %v897, 4
    %v899 = vadd.f32 %v897, %v898
    %v900 = vrot.slane %v899, 2
    %v901 = vadd.f32 %v899, %v900
    %v902 = vrot.slane %v901, 1
    %v903 = vadd.f32 %v901, %v902
    %v904 = vadd.f32 %v698, %v703
    %v905 = vrot.slane %v904, 4
    %v906 = vadd.f32 %v904, %v905
    %v907 = vrot.slane %v906, 2
    %v908 = vadd.f32 %v906, %v907
    %v909 = vrot.slane %v908, 1
    %v910 = vadd.f32 %v908, %v909
    %v911 = vsel %vm134, %v699, 0.0
    %v912 = vsel %vm134, %v704, 0.0
    %v913 = vadd.f32 %v911, %v912
    %v914 = vrot.slane %v913, 4
    %v915 = vadd.f32 %v913, %v914
    %v916 = vrot.slane %v915, 2
    %v917 = vadd.f32 %v915, %v916
    %v918 = vrot.slane %v917, 1
    %v919 = vadd.f32 %v917, %v918
    %v920 = vadd.f32 %v705, %v710
    %v921 = vrot.slane %v920, 4
    %v922 = vadd.f32 %v920, %v921
    %v923 = vrot.slane %v922, 2
    %v924 = vadd.f32 %v922, %v923
    %v925 = vrot.slane %v924, 1
    %v926 = vadd.f32 %v924, %v925
    %v927 = vadd.f32 %v706, %v711
    %v928 = vrot.slane %v927, 4
    %v929 = vadd.f32 %v927, %v928
    %v930 = vrot.slane %v929, 2
    %v931 = vadd.f32 %v929, %v930
    %v932 = vrot.slane %v931, 1
    %v933 = vadd.f32 %v931, %v932
    %v934 = vadd.f32 %v707, %v712
    %v935 = vrot.slane %v934, 4
    %v936 = vadd.f32 %v934, %v935
    %v937 = vrot.slane %v936, 2
    %v938 = vadd.f32 %v936, %v937
    %v939 = vrot.slane %v938, 1
    %v940 = vadd.f32 %v938, %v939
    %v941 = vadd.f32 %v708, %v713
    %v942 = vrot.slane %v941, 4
    %v943 = vadd.f32 %v941, %v942
    %v944 = vrot.slane %v943, 2
    %v945 = vadd.f32 %v943, %v944
    %v946 = vrot.slane %v945, 1
    %v947 = vadd.f32 %v945, %v946
    %v948 = vsel %vm134, %v709, 0.0
    %v949 = vsel %vm134, %v714, 0.0
    %v950 = vadd.f32 %v948, %v949
    %v951 = vrot.slane %v950, 4
    %v952 = vadd.f32 %v950, %v951
    %v953 = vrot.slane %v952, 2
    %v954 = vadd.f32 %v952, %v953
    %v955 = vrot.slane %v954, 1
    %v956 = vadd.f32 %v954, %v955
    %v957 = vadd.f32 %v715, %v720
    %v958 = vrot.slane %v957, 4
    %v959 = vadd.f32 %v957, %v958
    %v960 = vrot.slane %v959, 2
    %v961 = vadd.f32 %v959, %v960
    %v962 = vrot.slane %v961, 1
    %v963 = vadd.f32 %v961, %v962
    %v964 = vadd.f32 %v716, %v721
    %v965 = vrot.slane %v964, 4
    %v966 = vadd.f32 %v964, %v965
    %v967 = vrot.slane %v966, 2
    %v968 = vadd.f32 %v966, %v967
    %v969 = vrot.slane %v968, 1
    %v970 = vadd.f32 %v968, %v969
    %v971 = vadd.f32 %v717, %v722
    %v972 = vrot.slane %v971, 4
    %v973 = vadd.f32 %v971, %v972
    %v974 = vrot.slane %v973, 2
    %v975 = vadd.f32 %v973, %v974
    %v976 = vrot.slane %v975, 1
    %v977 = vadd.f32 %v975, %v976
    %v978 = vadd.f32 %v718, %v723
    %v979 = vrot.slane %v978, 4
    %v980 = vadd.f32 %v978, %v979
    %v981 = vrot.slane %v980, 2
    %v982 = vadd.f32 %v980, %v981
    %v983 = vrot.slane %v982, 1
    %v984 = vadd.f32 %v982, %v983
    %v985 = vsel %vm134, %v719, 0.0
    %v986 = vsel %vm134, %v724, 0.0
    %v987 = vadd.f32 %v985, %v986
    %v988 = vrot.slane %v987, 4
    %v989 = vadd.f32 %v987, %v988
    %v990 = vrot.slane %v989, 2
    %v991 = vadd.f32 %v989, %v990
    %v992 = vrot.slane %v991, 1
    %v993 = vadd.f32 %v991, %v992
    %v994 = vadd.f32 %v725, %v730
    %v995 = vrot.slane %v994, 4
    %v996 = vadd.f32 %v994, %v995
    %v997 = vrot.slane %v996, 2
    %v998 = vadd.f32 %v996, %v997
    %v999 = vrot.slane %v998, 1
    %v1000 = vadd.f32 %v998, %v999
    %v1001 = vadd.f32 %v726, %v731
    %v1002 = vrot.slane %v1001, 4
    %v1003 = vadd.f32 %v1001, %v1002
    %v1004 = vrot.slane %v1003, 2
    %v1005 = vadd.f32 %v1003, %v1004
    %v1006 = vrot.slane %v1005, 1
    %v1007 = vadd.f32 %v1005, %v1006
    %v1008 = vadd.f32 %v727, %v732
    %v1009 = vrot.slane %v1008, 4
    %v1010 = vadd.f32 %v1008, %v1009
    %v1011 = vrot.slane %v1010, 2
    %v1012 = vadd.f32 %v1010, %v1011
    %v1013 = vrot.slane %v1012, 1
    %v1014 = vadd.f32 %v1012, %v1013
    %v1015 = vadd.f32 %v728, %v733
    %v1016 = vrot.slane %v1015, 4
    %v1017 = vadd.f32 %v1015, %v1016
    %v1018 = vrot.slane %v1017, 2
    %v1019 = vadd.f32 %v1017, %v1018
    %v1020 = vrot.slane %v1019, 1
    %v1021 = vadd.f32 %v1019, %v1020
    %v1022 = vsel %vm134, %v729, 0.0
    %v1023 = vsel %vm134, %v734, 0.0
    %v1024 = vadd.f32 %v1022, %v1023
    %v1025 = vrot.slane %v1024, 4
    %v1026 = vadd.f32 %v1024, %v1025
    %v1027 = vrot.slane %v1026, 2
    %v1028 = vadd.f32 %v1026, %v1027
    %v1029 = vrot.slane %v1028, 1
    %v1030 = vadd.f32 %v1028, %v1029
    %v1031 = vadd.f32 %v484, %v494
    %v1032 = vrot.slane %v1031, 4
    %v1033 = vadd.f32 %v1031, %v1032
    %v1034 = vrot.slane %v1033, 2
    %v1035 = vadd.f32 %v1033, %v1034
    %v1036 = vrot.slane %v1035, 1
    %v1037 = vadd.f32 %v1035, %v1036
    %v1038 = vadd.f32 %v486, %v496
    %v1039 = vrot.slane %v1038, 4
    %v1040 = vadd.f32 %v1038, %v1039
    %v1041 = vrot.slane %v1040, 2
    %v1042 = vadd.f32 %v1040, %v1041
    %v1043 = vrot.slane %v1042, 1
    %v1044 = vadd.f32 %v1042, %v1043
    %v1045 = vadd.f32 %v488, %v498
    %v1046 = vrot.slane %v1045, 4
    %v1047 = vadd.f32 %v1045, %v1046
    %v1048 = vrot.slane %v1047, 2
    %v1049 = vadd.f32 %v1047, %v1048
    %v1050 = vrot.slane %v1049, 1
    %v1051 = vadd.f32 %v1049, %v1050
    %v1052 = vadd.f32 %v490, %v500
    %v1053 = vrot.slane %v1052, 4
    %v1054 = vadd.f32 %v1052, %v1053
    %v1055 = vrot.slane %v1054, 2
    %v1056 = vadd.f32 %v1054, %v1055
    %v1057 = vrot.slane %v1056, 1
    %v1058 = vadd.f32 %v1056, %v1057
    %v1059 = vsel %vm134, %v492, 0.0
    %v1060 = vsel %vm134, %v502, 0.0
    %v1061 = vadd.f32 %v1059, %v1060
    %v1062 = vrot.slane %v1061, 4
    %v1063 = vadd.f32 %v1061, %v1062
    %v1064 = vrot.slane %v1063, 2
    %v1065 = vadd.f32 %v1063, %v1064
    %v1066 = vrot.slane %v1065, 1
    %v1067 = vadd.f32 %v1065, %v1066
    %v1068 = vadd.f32 %v504, %v514
    %v1069 = vrot.slane %v1068, 4
    %v1070 = vadd.f32 %v1068, %v1069
    %v1071 = vrot.slane %v1070, 2
    %v1072 = vadd.f32 %v1070, %v1071
    %v1073 = vrot.slane %v1072, 1
    %v1074 = vadd.f32 %v1072, %v1073
    %v1075 = vadd.f32 %v506, %v516
    %v1076 = vrot.slane %v1075, 4
    %v1077 = vadd.f32 %v1075, %v1076
    %v1078 = vrot.slane %v1077, 2
    %v1079 = vadd.f32 %v1077, %v1078
    %v1080 = vrot.slane %v1079, 1
    %v1081 = vadd.f32 %v1079, %v1080
    %v1082 = vadd.f32 %v508, %v518
    %v1083 = vrot.slane %v1082, 4
    %v1084 = vadd.f32 %v1082, %v1083
    %v1085 = vrot.slane %v1084, 2
    %v1086 = vadd.f32 %v1084, %v1085
    %v1087 = vrot.slane %v1086, 1
    %v1088 = vadd.f32 %v1086, %v1087
    %v1089 = vadd.f32 %v510, %v520
    %v1090 = vrot.slane %v1089, 4
    %v1091 = vadd.f32 %v1089, %v1090
    %v1092 = vrot.slane %v1091, 2
    %v1093 = vadd.f32 %v1091, %v1092
    %v1094 = vrot.slane %v1093, 1
    %v1095 = vadd.f32 %v1093, %v1094
    %v1096 = vsel %vm134, %v512, 0.0
    %v1097 = vsel %vm134, %v522, 0.0
    %v1098 = vadd.f32 %v1096, %v1097
    %v1099 = vrot.slane %v1098, 4
    %v1100 = vadd.f32 %v1098, %v1099
    %v1101 = vrot.slane %v1100, 2
    %v1102 = vadd.f32 %v1100, %v1101
    %v1103 = vrot.slane %v1102, 1
    %v1104 = vadd.f32 %v1102, %v1103
    %v1105 = vadd.f32 %v524, %v534
    %v1106 = vrot.slane %v1105, 4
    %v1107 = vadd.f32 %v1105, %v1106
    %v1108 = vrot.slane %v1107, 2
    %v1109 = vadd.f32 %v1107, %v1108
    %v1110 = vrot.slane %v1109, 1
    %v1111 = vadd.f32 %v1109, %v1110
    %v1112 = vadd.f32 %v526, %v536
    %v1113 = vrot.slane %v1112, 4
    %v1114 = vadd.f32 %v1112, %v1113
    %v1115 = vrot.slane %v1114, 2
    %v1116 = vadd.f32 %v1114, %v1115
    %v1117 = vrot.slane %v1116, 1
    %v1118 = vadd.f32 %v1116, %v1117
    %v1119 = vadd.f32 %v528, %v538
    %v1120 = vrot.slane %v1119, 4
    %v1121 = vadd.f32 %v1119, %v1120
    %v1122 = vrot.slane %v1121, 2
    %v1123 = vadd.f32 %v1121, %v1122
    %v1124 = vrot.slane %v1123, 1
    %v1125 = vadd.f32 %v1123, %v1124
    %v1126 = vadd.f32 %v530, %v540
    %v1127 = vrot.slane %v1126, 4
    %v1128 = vadd.f32 %v1126, %v1127
    %v1129 = vrot.slane %v1128, 2
    %v1130 = vadd.f32 %v1128, %v1129
    %v1131 = vrot.slane %v1130, 1
    %v1132 = vadd.f32 %v1130, %v1131
    %v1133 = vsel %vm134, %v532, 0.0
    %v1134 = vsel %vm134, %v542, 0.0
    %v1135 = vadd.f32 %v1133, %v1134
    %v1136 = vrot.slane %v1135, 4
    %v1137 = vadd.f32 %v1135, %v1136
    %v1138 = vrot.slane %v1137, 2
    %v1139 = vadd.f32 %v1137, %v1138
    %v1140 = vrot.slane %v1139, 1
    %v1141 = vadd.f32 %v1139, %v1140
    %v1142 = vadd.f32 %v544, %v554
    %v1143 = vrot.slane %v1142, 4
    %v1144 = vadd.f32 %v1142, %v1143
    %v1145 = vrot.slane %v1144, 2
    %v1146 = vadd.f32 %v1144, %v1145
    %v1147 = vrot.slane %v1146, 1
    %v1148 = vadd.f32 %v1146, %v1147
    %v1149 = vadd.f32 %v546, %v556
    %v1150 = vrot.slane %v1149, 4
    %v1151 = vadd.f32 %v1149, %v1150
    %v1152 = vrot.slane %v1151, 2
    %v1153 = vadd.f32 %v1151, %v1152
    %v1154 = vrot.slane %v1153, 1
    %v1155 = vadd.f32 %v1153, %v1154
    %v1156 = vadd.f32 %v548, %v558
    %v1157 = vrot.slane %v1156, 4
    %v1158 = vadd.f32 %v1156, %v1157
    %v1159 = vrot.slane %v1158, 2
    %v1160 = vadd.f32 %v1158, %v1159
    %v1161 = vrot.slane %v1160, 1
    %v1162 = vadd.f32 %v1160, %v1161
    %v1163 = vadd.f32 %v550, %v560
    %v1164 = vrot.slane %v1163, 4
    %v1165 = vadd.f32 %v1163, %v1164
    %v1166 = vrot.slane %v1165, 2
    %v1167 = vadd.f32 %v1165, %v1166
    %v1168 = vrot.slane %v1167, 1
    %v1169 = vadd.f32 %v1167, %v1168
    %v1170 = vsel %vm134, %v552, 0.0
    %v1171 = vsel %vm134, %v562, 0.0
    %v1172 = vadd.f32 %v1170, %v1171
    %v1173 = vrot.slane %v1172, 4
    %v1174 = vadd.f32 %v1172, %v1173
    %v1175 = vrot.slane %v1174, 2
    %v1176 = vadd.f32 %v1174, %v1175
    %v1177 = vrot.slane %v1176, 1
    %v1178 = vadd.f32 %v1176, %v1177
    %v1179 = vadd.f32 %v564, %v574
    %v1180 = vrot.slane %v1179, 4
    %v1181 = vadd.f32 %v1179, %v1180
    %v1182 = vrot.slane %v1181, 2
    %v1183 = vadd.f32 %v1181, %v1182
    %v1184 = vrot.slane %v1183, 1
    %v1185 = vadd.f32 %v1183, %v1184
    %v1186 = vadd.f32 %v566, %v576
    %v1187 = vrot.slane %v1186, 4
    %v1188 = vadd.f32 %v1186, %v1187
    %v1189 = vrot.slane %v1188, 2
    %v1190 = vadd.f32 %v1188, %v1189
    %v1191 = vrot.slane %v1190, 1
    %v1192 = vadd.f32 %v1190, %v1191
    %v1193 = vadd.f32 %v568, %v578
    %v1194 = vrot.slane %v1193, 4
    %v1195 = vadd.f32 %v1193, %v1194
    %v1196 = vrot.slane %v1195, 2
    %v1197 = vadd.f32 %v1195, %v1196
    %v1198 = vrot.slane %v1197, 1
    %v1199 = vadd.f32 %v1197, %v1198
    %v1200 = vadd.f32 %v570, %v580
    %v1201 = vrot.slane %v1200, 4
    %v1202 = vadd.f32 %v1200, %v1201
    %v1203 = vrot.slane %v1202, 2
    %v1204 = vadd.f32 %v1202, %v1203
    %v1205 = vrot.slane %v1204, 1
    %v1206 = vadd.f32 %v1204, %v1205
    %v1207 = vsel %vm134, %v572, 0.0
    %v1208 = vsel %vm134, %v582, 0.0
    %v1209 = vadd.f32 %v1207, %v1208
    %v1210 = vrot.slane %v1209, 4
    %v1211 = vadd.f32 %v1209, %v1210
    %v1212 = vrot.slane %v1211, 2
    %v1213 = vadd.f32 %v1211, %v1212
    %v1214 = vrot.slane %v1213, 1
    %v1215 = vadd.f32 %v1213, %v1214
    %v1216 = vadd.f32 %v584, %v594
    %v1217 = vrot.slane %v1216, 4
    %v1218 = vadd.f32 %v1216, %v1217
    %v1219 = vrot.slane %v1218, 2
    %v1220 = vadd.f32 %v1218, %v1219
    %v1221 = vrot.slane %v1220, 1
    %v1222 = vadd.f32 %v1220, %v1221
    %v1223 = vadd.f32 %v586, %v596
    %v1224 = vrot.slane %v1223, 4
    %v1225 = vadd.f32 %v1223, %v1224
    %v1226 = vrot.slane %v1225, 2
    %v1227 = vadd.f32 %v1225, %v1226
    %v1228 = vrot.slane %v1227, 1
    %v1229 = vadd.f32 %v1227, %v1228
    %v1230 = vadd.f32 %v588, %v598
    %v1231 = vrot.slane %v1230, 4
    %v1232 = vadd.f32 %v1230, %v1231
    %v1233 = vrot.slane %v1232, 2
    %v1234 = vadd.f32 %v1232, %v1233
    %v1235 = vrot.slane %v1234, 1
    %v1236 = vadd.f32 %v1234, %v1235
    %v1237 = vadd.f32 %v590, %v600
    %v1238 = vrot.slane %v1237, 4
    %v1239 = vadd.f32 %v1237, %v1238
    %v1240 = vrot.slane %v1239, 2
    %v1241 = vadd.f32 %v1239, %v1240
    %v1242 = vrot.slane %v1241, 1
    %v1243 = vadd.f32 %v1241, %v1242
    %v1244 = vsel %vm134, %v592, 0.0
    %v1245 = vsel %vm134, %v602, 0.0
    %v1246 = vadd.f32 %v1244, %v1245
    %v1247 = vrot.slane %v1246, 4
    %v1248 = vadd.f32 %v1246, %v1247
    %v1249 = vrot.slane %v1248, 2
    %v1250 = vadd.f32 %v1248, %v1249
    %v1251 = vrot.slane %v1250, 1
    %v1252 = vadd.f32 %v1250, %v1251
    %v1253 = vadd.f32 %v604, %v614
    %v1254 = vrot.slane %v1253, 4
    %v1255 = vadd.f32 %v1253, %v1254
    %v1256 = vrot.slane %v1255, 2
    %v1257 = vadd.f32 %v1255, %v1256
    %v1258 = vrot.slane %v1257, 1
    %v1259 = vadd.f32 %v1257, %v1258
    %v1260 = vadd.f32 %v606, %v616
    %v1261 = vrot.slane %v1260, 4
    %v1262 = vadd.f32 %v1260, %v1261
    %v1263 = vrot.slane %v1262, 2
    %v1264 = vadd.f32 %v1262, %v1263
    %v1265 = vrot.slane %v1264, 1
    %v1266 = vadd.f32 %v1264, %v1265
    %v1267 = vadd.f32 %v608, %v618
    %v1268 = vrot.slane %v1267, 4
    %v1269 = vadd.f32 %v1267, %v1268
    %v1270 = vrot.slane %v1269, 2
    %v1271 = vadd.f32 %v1269, %v1270
    %v1272 = vrot.slane %v1271, 1
    %v1273 = vadd.f32 %v1271, %v1272
    %v1274 = vadd.f32 %v610, %v620
    %v1275 = vrot.slane %v1274, 4
    %v1276 = vadd.f32 %v1274, %v1275
    %v1277 = vrot.slane %v1276, 2
    %v1278 = vadd.f32 %v1276, %v1277
    %v1279 = vrot.slane %v1278, 1
    %v1280 = vadd.f32 %v1278, %v1279
    %v1281 = vsel %vm134, %v612, 0.0
    %v1282 = vsel %vm134, %v622, 0.0
    %v1283 = vadd.f32 %v1281, %v1282
    %v1284 = vrot.slane %v1283, 4
    %v1285 = vadd.f32 %v1283, %v1284
    %v1286 = vrot.slane %v1285, 2
    %v1287 = vadd.f32 %v1285, %v1286
    %v1288 = vrot.slane %v1287, 1
    %v1289 = vadd.f32 %v1287, %v1288
    %v1290 = vadd.f32 %v624, %v634
    %v1291 = vrot.slane %v1290, 4
    %v1292 = vadd.f32 %v1290, %v1291
    %v1293 = vrot.slane %v1292, 2
    %v1294 = vadd.f32 %v1292, %v1293
    %v1295 = vrot.slane %v1294, 1
    %v1296 = vadd.f32 %v1294, %v1295
    %v1297 = vadd.f32 %v626, %v636
    %v1298 = vrot.slane %v1297, 4
    %v1299 = vadd.f32 %v1297, %v1298
    %v1300 = vrot.slane %v1299, 2
    %v1301 = vadd.f32 %v1299, %v1300
    %v1302 = vrot.slane %v1301, 1
    %v1303 = vadd.f32 %v1301, %v1302
    %v1304 = vadd.f32 %v628, %v638
    %v1305 = vrot.slane %v1304, 4
    %v1306 = vadd.f32 %v1304, %v1305
    %v1307 = vrot.slane %v1306, 2
    %v1308 = vadd.f32 %v1306, %v1307
    %v1309 = vrot.slane %v1308, 1
    %v1310 = vadd.f32 %v1308, %v1309
    %v1311 = vadd.f32 %v630, %v640
    %v1312 = vrot.slane %v1311, 4
    %v1313 = vadd.f32 %v1311, %v1312
    %v1314 = vrot.slane %v1313, 2
    %v1315 = vadd.f32 %v1313, %v1314
    %v1316 = vrot.slane %v1315, 1
    %v1317 = vadd.f32 %v1315, %v1316
    %v1318 = vsel %vm134, %v632, 0.0
    %v1319 = vsel %vm134, %v642, 0.0
    %v1320 = vadd.f32 %v1318, %v1319
    %v1321 = vrot.slane %v1320, 4
    %v1322 = vadd.f32 %v1320, %v1321
    %v1323 = vrot.slane %v1322, 2
    %v1324 = vadd.f32 %v1322, %v1323
    %v1325 = vrot.slane %v1324, 1
    %v1326 = vadd.f32 %v1324, %v1325
    %v1327 = vrcp.pop %v1037
    %v1328 = vrcp.pop %v1044
    %v1329 = vrcp.pop %v1051
    %v1330 = vrcp.pop %v1058
    %v1331 = vrcp.pop %v1067
    %v1332 = vrcp.pop %v1074
    %v1333 = vrcp.pop %v1081
    %v1334 = vrcp.pop %v1088
    %v1335 = vrcp.pop %v1095
    %v1336 = vrcp.pop %v1104
    %v1337 = vrcp.pop %v1111
    %v1338 = vrcp.pop %v1118
    %v1339 = vrcp.pop %v1125
    %v1340 = vrcp.pop %v1132
    %v1341 = vrcp.pop %v1141
    %v1342 = vrcp.pop %v1148
    %v1343 = vrcp.pop %v1155
    %v1344 = vrcp.pop %v1162
    %v1345 = vrcp.pop %v1169
    %v1346 = vrcp.pop %v1178
    %v1347 = vrcp.pop %v1185
    %v1348 = vrcp.pop %v1192
    %v1349 = vrcp.pop %v1199
    %v1350 = vrcp.pop %v1206
    %v1351 = vrcp.pop %v1215
    %v1352 = vrcp.pop %v1222
    %v1353 = vrcp.pop %v1229
    %v1354 = vrcp.pop %v1236
    %v1355 = vrcp.pop %v1243
    %v1356 = vrcp.pop %v1252
    %v1357 = vrcp.pop %v1259
    %v1358 = vrcp.pop %v1266
    %v1359 = vrcp.pop %v1273
    %v1360 = vrcp.pop %v1280
    %v1361 = vrcp.pop %v1289
    %v1362 = vrcp.pop %v1296
    %v1363 = vrcp.pop %v1303
    %v1364 = vrcp.pop %v1310
    %v1365 = vrcp.pop %v1317
    %v1366 = vrcp.pop %v1326
    %v1367 = vmul.f32 %v741, %v1327
    %v1368 = vmul.f32 %v748, %v1328
    %v1369 = vmul.f32 %v755, %v1329
    %v1370 = vmul.f32 %v762, %v1330
    %v1371 = vmul.f32 %v771, %v1331
    %v1372 = vmul.f32 %v778, %v1332
    %v1373 = vmul.f32 %v785, %v1333
    %v1374 = vmul.f32 %v792, %v1334
    %v1375 = vmul.f32 %v799, %v1335
    %v1376 = vmul.f32 %v808, %v1336
    %v1377 = vmul.f32 %v815, %v1337
    %v1378 = vmul.f32 %v822, %v1338
    %v1379 = vmul.f32 %v829, %v1339
    %v1380 = vmul.f32 %v836, %v1340
    %v1381 = vmul.f32 %v845, %v1341
    %v1382 = vmul.f32 %v852, %v1342
    %v1383 = vmul.f32 %v859, %v1343
    %v1384 = vmul.f32 %v866, %v1344
    %v1385 = vmul.f32 %v873, %v1345
    %v1386 = vmul.f32 %v882, %v1346
    %v1387 = vmul.f32 %v889, %v1347
    %v1388 = vmul.f32 %v896, %v1348
    %v1389 = vmul.f32 %v903, %v1349
    %v1390 = vmul.f32 %v910, %v1350
    %v1391 = vmul.f32 %v919, %v1351
    %v1392 = vmul.f32 %v926, %v1352
    %v1393 = vmul.f32 %v933, %v1353
    %v1394 = vmul.f32 %v940, %v1354
    %v1395 = vmul.f32 %v947, %v1355
    %v1396 = vmul.f32 %v956, %v1356
    %v1397 = vmul.f32 %v963, %v1357
    %v1398 = vmul.f32 %v970, %v1358
    %v1399 = vmul.f32 %v977, %v1359
    %v1400 = vmul.f32 %v984, %v1360
    %v1401 = vmul.f32 %v993, %v1361
    %v1402 = vmul.f32 %v1000, %v1362
    %v1403 = vmul.f32 %v1007, %v1363
    %v1404 = vmul.f32 %v1014, %v1364
    %v1405 = vmul.f32 %v1021, %v1365
    %v1406 = vmul.f32 %v1030, %v1366
    %vm1447 = vcmask 1041409
    %v1448 = vsel %vm1447, %v1372, %v1367
    %vm1449 = vcmask 1042434
    %v1450 = vsel %vm1449, %v1377, %v1448
    %vm1451 = vcmask 1043459
    %v1452 = vsel %vm1451, %v1382, %v1450
    %vm1453 = vcmask 1044484
    %v1454 = vsel %vm1453, %v1387, %v1452
    %vm1455 = vcmask 1045509
    %v1456 = vsel %vm1455, %v1392, %v1454
    %vm1457 = vcmask 1046534
    %v1458 = vsel %vm1457, %v1397, %v1456
    %vm1459 = vcmask 1047559
    %v1460 = vsel %vm1459, %v1402, %v1458
    %v1461 = vsel %vm1447, %v1373, %v1368
    %v1462 = vsel %vm1449, %v1378, %v1461
    %v1463 = vsel %vm1451, %v1383, %v1462
    %v1464 = vsel %vm1453, %v1388, %v1463
    %v1465 = vsel %vm1455, %v1393, %v1464
    %v1466 = vsel %vm1457, %v1398, %v1465
    %v1467 = vsel %vm1459, %v1403, %v1466
    %v1468 = vsel %vm1447, %v1374, %v1369
    %v1469 = vsel %vm1449, %v1379, %v1468
    %v1470 = vsel %vm1451, %v1384, %v1469
    %v1471 = vsel %vm1453, %v1389, %v1470
    %v1472 = vsel %vm1455, %v1394, %v1471
    %v1473 = vsel %vm1457, %v1399, %v1472
    %v1474 = vsel %vm1459, %v1404, %v1473
    %v1475 = vsel %vm1447, %v1375, %v1370
    %v1476 = vsel %vm1449, %v1380, %v1475
    %v1477 = vsel %vm1451, %v1385, %v1476
    %v1478 = vsel %vm1453, %v1390, %v1477
    %v1479 = vsel %vm1455, %v1395, %v1478
    %v1480 = vsel %vm1457, %v1400, %v1479
    %v1481 = vsel %vm1459, %v1405, %v1480
    %v1482 = vsel %vm1447, %v1376, %v1371
    %v1483 = vsel %vm1449, %v1381, %v1482
    %v1484 = vsel %vm1451, %v1386, %v1483
    %v1485 = vsel %vm1453, %v1391, %v1484
    %v1486 = vsel %vm1455, %v1396, %v1485
    %v1487 = vsel %vm1457, %v1401, %v1486
    %v1488 = vsel %vm1459, %v1406, %v1487
    %1494 = vst [vmem:[#allocation5] sm:$0xff] %v1460
    %1495 = vst [vmem:[#allocation5 + $0x8] sm:$0xff] %v1467
    %1496 = vst [vmem:[#allocation5 + $0x10] sm:$0xff] %v1474
    %1497 = vst [vmem:[#allocation5 + $0x18] sm:$0xff] %v1481
    %1498 = vst.msk [vmem:[#allocation5 + $0x20] sm:$0xff] %vm134, %v1488
    // Predicated region
    $region14: #{tpu_custom_call.1} parent=1 // pred_check
      _
    $region15: #{tpu_custom_call.1} parent=1 // pred_check_branch
      %1500 = sbr.rel (0) target = $region17
    $region16: #{tpu_custom_call.1} parent=1 // pred_region
      %s1502 = ssub.s32 640, 640
      %1503 = vsyncadd [#allocation4], %s1502
      %s1505 = sshll.u32 [#allocation5], 4
      %s1506 = int_to_ptr.vmem [resolvable:$true] %s1505
      %1508 = dma.vmem_to_hbm [thread:$0]  %s1506, 640, %s2, [#allocation4]
    $region17: #{tpu_custom_call.1} parent=1 // pred_fallthru
      _
    // Predicated region
    $region18: #{tpu_custom_call.1} parent=1 // pred_check
      _
    $region19: #{tpu_custom_call.1} parent=1 // pred_check_branch
      %1510 = sbr.rel (0) target = $region21
    $region20: #{tpu_custom_call.1} parent=1 // pred_region
      %1511 = dma.done [#allocation4], 640
    $region21: #{tpu_custom_call.1} parent=1 // pred_fallthru
      _
    %1512 = vsyncpa [#allocation3], 1
    %1513 = vsyncpa [#allocation4], 1

</llo_original>
